<compile_context>
chip_gen: v7x
topology: tpu7x:2x2x1
jax: 0.10.0
libtpu: 0.0.40
codegen_flags: <defaults>
</compile_context>

<pallas_src>
import functools

import jax
import jax.numpy as jnp
from jax import lax
from jax.experimental import pallas as pl
from jax.experimental.pallas import tpu as pltpu


def _tcn_kernel(mask_ref, x_ref, *args, block_cfg, K):
    """block_cfg: tuple of (dilation, has_downsample, cout) per TemporalBlock."""
    o_ref = args[-1]
    w_refs = args[:-1]

    mask = mask_ref[...]            # (1, lanes): 0.0 on pad columns, 1.0 on data
    a = x_ref[...]                  # (C0, lanes) f32, pad columns already zero

    def stack_taps(v, dil):
        # (C, lanes) -> (K*C, lanes) bf16; row-block k holds roll(v, (K-1-k)*dil)
        # (tap K-1 is the unshifted copy). Roll wrap-around / cross-segment leakage
        # land only in pad columns (shift <= pad_cols), masked downstream.
        if K == 1:
            return v.astype(jnp.bfloat16)
        parts = [v if k == K - 1 else pltpu.roll(v, (K - 1 - k) * dil, axis=1)
                 for k in range(K)]
        return jnp.concatenate(parts, axis=0).astype(jnp.bfloat16)

    n_blocks = len(block_cfg)
    idx = 0
    for bi, (dil, has_ds, cout) in enumerate(block_cfg):
        w1, b1, w2, b2 = w_refs[idx:idx + 4]
        idx += 4

        # conv1 (+ fused 1x1 downsample rows when has_ds): one MXU matmul
        h1 = jnp.dot(w1[...], stack_taps(a, dil),
                     preferred_element_type=jnp.float32) + b1[...]
        y = jnp.maximum(h1[:cout], 0.0) * mask      # chomp + relu, keep pads zero
        res = h1[cout:] if has_ds else a            # residual (no relu, no mask)

        # conv2: one MXU matmul
        z = jnp.maximum(jnp.dot(w2[...], stack_taps(y, dil),
                                preferred_element_type=jnp.float32) + b2[...], 0.0)

        a = jnp.maximum(z + res, 0.0)               # block-output relu
        if bi != n_blocks - 1:
            a = a * mask                            # keep padded-segment invariant

    o_ref[...] = a.astype(o_ref.dtype)


def tcn_forward(x, blocks_params, *, K, vmem_budget_bytes=12 * 1024 * 1024):
    """x: (B, C_in, L) float32. blocks_params: list of dicts with
    dilation, w1 (Cout,Cin,K), b1, w2 (Cout,Cout,K), b2, optional wd (Cout,Cin,1), bd."""
    B, c0, L = x.shape
    p_max = max((K - 1) * int(bp['dilation']) for bp in blocks_params)
    seg = pl.cdiv(L + p_max, 128) * 128      # lane-dense segment width (>= L+p_max)
    pad_cols = seg - L                       # >= p_max

    c_last = int(blocks_params[-1]['w1'].shape[0])
    c_max = max([c0] + [int(bp['w1'].shape[0]) for bp in blocks_params])

    # --- batch tiling: >=4 (even) grid steps when B allows so both v7x TCs get
    #     >=2 steps each and single-TC chips get real DMA/compute pipelining;
    #     bounded by a conservative VMEM budget (tighter 32 MiB scoped on v7x). ---
    bytes_per_b = seg * 4 * (2 * c0 + 2 * c_last + (4 + K) * c_max)  # rough estimate
    bt_max = max(1, vmem_budget_bytes // bytes_per_b)
    n_tiles = 4 if B >= 4 else (2 if B >= 2 else 1)
    n_tiles = max(n_tiles, pl.cdiv(B, bt_max))      # VMEM bound may force more tiles
    if n_tiles > 1 and n_tiles % 2 == 1:
        n_tiles += 1                                 # keep even for megacore split
    bt = pl.cdiv(B, n_tiles)
    B_pad = bt * n_tiles                             # odd/non-divisible B: zero-pad
    lanes = bt * seg

    # activation buffer (c0, B_pad*seg): each segment = [pad_cols zeros | sequence]
    xt = jnp.transpose(x.astype(jnp.float32), (1, 0, 2))              # (c0, B, L)
    xt = jnp.pad(xt, ((0, 0), (0, B_pad - B), (pad_cols, 0)))         # (c0, B_pad, seg)
    x_seg = xt.reshape(c0, B_pad * seg)

    # per-tile lane mask (same for every tile): 0 on pad columns, 1 on data columns
    col = jnp.arange(seg, dtype=jnp.int32)
    mask = jnp.tile((col >= pad_cols).astype(jnp.float32), bt).reshape(1, lanes)

    flat_inputs = [mask, x_seg]
    in_specs = [
        pl.BlockSpec((1, lanes), lambda n: (0, 0)),
        pl.BlockSpec((c0, lanes), lambda n: (0, n)),
    ]
    block_cfg = []
    for bp in blocks_params:
        cout, cin, kk = bp['w1'].shape
        assert kk == K
        # stacked-tap weights: column block k multiplies roll(v, (K-1-k)*d)
        w1s = jnp.transpose(bp['w1'], (0, 2, 1)).reshape(cout, K * cin)
        b1 = bp['b1'].reshape(cout, 1)
        has_ds = 'wd' in bp
        if has_ds:
            # fold the 1x1 downsample into conv1's matmul as extra output rows,
            # aligned with the unshifted tap's (k = K-1) column block
            wd = bp['wd'][:, :, 0]
            wd_ext = jnp.concatenate(
                [jnp.zeros((cout, (K - 1) * cin), wd.dtype), wd], axis=1)
            w1s = jnp.concatenate([w1s, wd_ext], axis=0)                # (2*cout, K*cin)
            b1 = jnp.concatenate([b1, bp['bd'].reshape(cout, 1)], axis=0)
        w2s = jnp.transpose(bp['w2'], (0, 2, 1)).reshape(cout, K * cout)
        b2 = bp['b2'].reshape(cout, 1)
        for w in (w1s.astype(jnp.bfloat16), b1.astype(jnp.float32),
                  w2s.astype(jnp.bfloat16), b2.astype(jnp.float32)):
            flat_inputs.append(w)
            in_specs.append(pl.BlockSpec(w.shape, lambda n: (0, 0)))
        block_cfg.append((int(bp['dilation']), has_ds, int(cout)))

    kernel = functools.partial(_tcn_kernel, block_cfg=tuple(block_cfg), K=K)
    out_seg = pl.pallas_call(
        kernel,
        out_shape=jax.ShapeDtypeStruct((c_last, B_pad * seg), jnp.float32),
        grid_spec=pltpu.PrefetchScalarGridSpec(
            num_scalar_prefetch=0,
            grid=(n_tiles,),
            in_specs=in_specs,
            out_specs=pl.BlockSpec((c_last, lanes), lambda n: (0, n)),
        ),
        compiler_params=pltpu.CompilerParams(
            dimension_semantics=("parallel",),
            vmem_limit_bytes=32 * 1024 * 1024),
    )(*flat_inputs)

    out = out_seg.reshape(c_last, B_pad, seg)[:, :B, pad_cols:]       # drop pads
    return jnp.transpose(out, (1, 0, 2))                              # (B, C_last, L)


def ref_forward(x, blocks_params, *, K):
    """Pure-JAX reference mirroring the PyTorch forward in eval mode.
    Conv1d(pad=(K-1)*d both sides) + Chomp == left-only causal padding of (K-1)*d."""
    def conv(v, w, b, pad, rdil):
        y = lax.conv_general_dilated(
            v, w, window_strides=(1,), padding=[(pad, 0)], rhs_dilation=(rdil,),
            dimension_numbers=('NCH', 'OIH', 'NCH'),
            precision=lax.Precision.HIGHEST)
        return y + b[None, :, None]

    a = x
    for bp in blocks_params:
        d = int(bp['dilation'])
        p = (K - 1) * d
        y = jax.nn.relu(conv(a, bp['w1'], bp['b1'], p, d))
        y = jax.nn.relu(conv(y, bp['w2'], bp['b2'], p, d))
        res = a if 'wd' not in bp else conv(a, bp['wd'], bp['bd'], 0, 1)
        a = jax.nn.relu(y + res)
    return a


if __name__ == "__main__":
    key = jax.random.PRNGKey(0)
    B, C_in, L = 4, 8, 120
    num_channels = [16, 16, 16]     # TemporalConvNet(num_inputs=8, num_channels=[16]*3)
    K = 2                           # default kernel_size

    keys = iter(jax.random.split(key, 64))
    blocks_params = []
    cin = C_in
    for i, cout in enumerate(num_channels):
        bp = dict(
            dilation=2 ** i,
            w1=0.1 * jax.random.normal(next(keys), (cout, cin, K), jnp.float32),
            b1=0.1 * jax.random.normal(next(keys), (cout,), jnp.float32),
            w2=0.1 * jax.random.normal(next(keys), (cout, cout, K), jnp.float32),
            b2=0.1 * jax.random.normal(next(keys), (cout,), jnp.float32),
        )
        if cin != cout:   # downsample = Conv1d(cin, cout, 1)
            bp['wd'] = 0.1 * jax.random.normal(next(keys), (cout, cin, 1), jnp.float32)
            bp['bd'] = 0.1 * jax.random.normal(next(keys), (cout,), jnp.float32)
        blocks_params.append(bp)
        cin = cout
    x = jax.random.normal(next(keys), (B, C_in, L), jnp.float32)

    out = jax.block_until_ready(tcn_forward(x, blocks_params, K=K))
    ref = ref_forward(x, blocks_params, K=K)
    assert out.shape == (B, num_channels[-1], L) and out.dtype == jnp.float32
    err = float(jnp.max(jnp.abs(out - ref)))
    # bf16 MXU operands (f32 accumulation) -> tolerance relaxed vs pure-f32 run
    assert jnp.allclose(out, ref, rtol=5e-2, atol=5e-2), f"max abs err {err}"
    print("KERNEL_OK")
</pallas_src>

<mosaic_0001>
module attributes {stable_mosaic.version = 11 : i64} {
  func.func @_tcn_kernel(%arg0: i32, %arg1: memref<1x128xf32, #tpu.memory_space<vmem>>, %arg2: memref<8x128xf32, #tpu.memory_space<vmem>>, %arg3: memref<32x16xbf16, #tpu.memory_space<vmem>>, %arg4: memref<32x1xf32, #tpu.memory_space<vmem>>, %arg5: memref<16x32xbf16, #tpu.memory_space<vmem>>, %arg6: memref<16x1xf32, #tpu.memory_space<vmem>>, %arg7: memref<16x32xbf16, #tpu.memory_space<vmem>>, %arg8: memref<16x1xf32, #tpu.memory_space<vmem>>, %arg9: memref<16x32xbf16, #tpu.memory_space<vmem>>, %arg10: memref<16x1xf32, #tpu.memory_space<vmem>>, %arg11: memref<16x32xbf16, #tpu.memory_space<vmem>>, %arg12: memref<16x1xf32, #tpu.memory_space<vmem>>, %arg13: memref<16x32xbf16, #tpu.memory_space<vmem>>, %arg14: memref<16x1xf32, #tpu.memory_space<vmem>>, %arg15: memref<16x128xf32, #tpu.memory_space<vmem>>) attributes {dimension_semantics = [#tpu.dimension_semantics<parallel>], iteration_bounds = array<i64: 4>, scalar_prefetch = 0 : i64, scratch_operands = 0 : i64, tpu.core_type = #tpu.core_type<tc>, window_params = [{pipeline_mode = #tpu.pipeline_mode<synchronous>, transform_indices = @transform_0, window_bounds = array<i64: 1, 128>}, {transform_indices = @transform_1, window_bounds = array<i64: 8, 128>}, {pipeline_mode = #tpu.pipeline_mode<synchronous>, transform_indices = @transform_2, window_bounds = array<i64: 32, 16>}, {pipeline_mode = #tpu.pipeline_mode<synchronous>, transform_indices = @transform_3, window_bounds = array<i64: 32, 1>}, {pipeline_mode = #tpu.pipeline_mode<synchronous>, transform_indices = @transform_4, window_bounds = array<i64: 16, 32>}, {pipeline_mode = #tpu.pipeline_mode<synchronous>, transform_indices = @transform_5, window_bounds = array<i64: 16, 1>}, {pipeline_mode = #tpu.pipeline_mode<synchronous>, transform_indices = @transform_6, window_bounds = array<i64: 16, 32>}, {pipeline_mode = #tpu.pipeline_mode<synchronous>, transform_indices = @transform_7, window_bounds = array<i64: 16, 1>}, {pipeline_mode = #tpu.pipeline_mode<synchronous>, transform_indices = @transform_8, window_bounds = array<i64: 16, 32>}, {pipeline_mode = #tpu.pipeline_mode<synchronous>, transform_indices = @transform_9, window_bounds = array<i64: 16, 1>}, {pipeline_mode = #tpu.pipeline_mode<synchronous>, transform_indices = @transform_10, window_bounds = array<i64: 16, 32>}, {pipeline_mode = #tpu.pipeline_mode<synchronous>, transform_indices = @transform_11, window_bounds = array<i64: 16, 1>}, {pipeline_mode = #tpu.pipeline_mode<synchronous>, transform_indices = @transform_12, window_bounds = array<i64: 16, 32>}, {pipeline_mode = #tpu.pipeline_mode<synchronous>, transform_indices = @transform_13, window_bounds = array<i64: 16, 1>}, {transform_indices = @transform_14, window_bounds = array<i64: 16, 128>}]} {
    %c0 = arith.constant 0 : index
    %c0_0 = arith.constant 0 : index
    %0 = vector.load %arg1[%c0, %c0_0] : memref<1x128xf32, #tpu.memory_space<vmem>>, vector<1x128xf32>
    %c0_1 = arith.constant 0 : index
    %c0_2 = arith.constant 0 : index
    %1 = vector.load %arg2[%c0_1, %c0_2] : memref<8x128xf32, #tpu.memory_space<vmem>>, vector<8x128xf32>
    %c0_3 = arith.constant 0 : index
    %c0_4 = arith.constant 0 : index
    %2 = vector.load %arg3[%c0_3, %c0_4] : memref<32x16xbf16, #tpu.memory_space<vmem>>, vector<32x16xbf16>
    %c1_i32 = arith.constant 1 : i32
    %3 = tpu.dynamic_rotate %1 by %c1_i32 dim 1 : vector<8x128xf32>, i32 -> vector<8x128xf32>
    %4 = tpu.concatenate %3, %1 in 0 : vector<8x128xf32>, vector<8x128xf32> -> vector<16x128xf32>
    %5 = arith.truncf %4 : vector<16x128xf32> to vector<16x128xbf16>
    %cst = arith.constant dense<0.000000e+00> : vector<32x128xf32>
    %6 = tpu.matmul %2, %5, %cst {dimension_numbers = #tpu.dot_dimension_numbers<[1], [0], [0], [1], [0, 0, 1, 1], [], []>} : vector<32x16xbf16>, vector<16x128xbf16>, vector<32x128xf32> -> vector<32x128xf32>
    %c0_5 = arith.constant 0 : index
    %c0_6 = arith.constant 0 : index
    %7 = vector.load %arg4[%c0_5, %c0_6] : memref<32x1xf32, #tpu.memory_space<vmem>>, vector<32x1xf32>
    %8 = vector.broadcast %7 : vector<32x1xf32> to vector<32x128xf32>
    %9 = arith.addf %6, %8 : vector<32x128xf32>
    %10 = vector.extract_strided_slice %9 {offsets = [0, 0], sizes = [16, 128], strides = [1, 1]} : vector<32x128xf32> to vector<16x128xf32>
    %cst_7 = arith.constant 0.000000e+00 : f32
    %11 = vector.broadcast %cst_7 : f32 to vector<16x128xf32>
    %12 = arith.maximumf %10, %11 : vector<16x128xf32>
    %13 = vector.broadcast %0 : vector<1x128xf32> to vector<16x128xf32>
    %14 = arith.mulf %12, %13 : vector<16x128xf32>
    %15 = vector.extract_strided_slice %9 {offsets = [16, 0], sizes = [16, 128], strides = [1, 1]} : vector<32x128xf32> to vector<16x128xf32>
    %c0_8 = arith.constant 0 : index
    %c0_9 = arith.constant 0 : index
    %16 = vector.load %arg5[%c0_8, %c0_9] : memref<16x32xbf16, #tpu.memory_space<vmem>>, vector<16x32xbf16>
    %c1_i32_10 = arith.constant 1 : i32
    %17 = tpu.dynamic_rotate %14 by %c1_i32_10 dim 1 : vector<16x128xf32>, i32 -> vector<16x128xf32>
    %18 = tpu.concatenate %17, %14 in 0 : vector<16x128xf32>, vector<16x128xf32> -> vector<32x128xf32>
    %19 = arith.truncf %18 : vector<32x128xf32> to vector<32x128xbf16>
    %cst_11 = arith.constant dense<0.000000e+00> : vector<16x128xf32>
    %20 = tpu.matmul %16, %19, %cst_11 {dimension_numbers = #tpu.dot_dimension_numbers<[1], [0], [0], [1], [0, 0, 1, 1], [], []>} : vector<16x32xbf16>, vector<32x128xbf16>, vector<16x128xf32> -> vector<16x128xf32>
    %c0_12 = arith.constant 0 : index
    %c0_13 = arith.constant 0 : index
    %21 = vector.load %arg6[%c0_12, %c0_13] : memref<16x1xf32, #tpu.memory_space<vmem>>, vector<16x1xf32>
    %22 = vector.broadcast %21 : vector<16x1xf32> to vector<16x128xf32>
    %23 = arith.addf %20, %22 : vector<16x128xf32>
    %cst_14 = arith.constant 0.000000e+00 : f32
    %24 = vector.broadcast %cst_14 : f32 to vector<16x128xf32>
    %25 = arith.maximumf %23, %24 : vector<16x128xf32>
    %26 = arith.addf %25, %15 : vector<16x128xf32>
    %cst_15 = arith.constant 0.000000e+00 : f32
    %27 = vector.broadcast %cst_15 : f32 to vector<16x128xf32>
    %28 = arith.maximumf %26, %27 : vector<16x128xf32>
    %29 = vector.broadcast %0 : vector<1x128xf32> to vector<16x128xf32>
    %30 = arith.mulf %28, %29 : vector<16x128xf32>
    %c0_16 = arith.constant 0 : index
    %c0_17 = arith.constant 0 : index
    %31 = vector.load %arg7[%c0_16, %c0_17] : memref<16x32xbf16, #tpu.memory_space<vmem>>, vector<16x32xbf16>
    %c2_i32 = arith.constant 2 : i32
    %32 = tpu.dynamic_rotate %30 by %c2_i32 dim 1 : vector<16x128xf32>, i32 -> vector<16x128xf32>
    %33 = tpu.concatenate %32, %30 in 0 : vector<16x128xf32>, vector<16x128xf32> -> vector<32x128xf32>
    %34 = arith.truncf %33 : vector<32x128xf32> to vector<32x128xbf16>
    %cst_18 = arith.constant dense<0.000000e+00> : vector<16x128xf32>
    %35 = tpu.matmul %31, %34, %cst_18 {dimension_numbers = #tpu.dot_dimension_numbers<[1], [0], [0], [1], [0, 0, 1, 1], [], []>} : vector<16x32xbf16>, vector<32x128xbf16>, vector<16x128xf32> -> vector<16x128xf32>
    %c0_19 = arith.constant 0 : index
    %c0_20 = arith.constant 0 : index
    %36 = vector.load %arg8[%c0_19, %c0_20] : memref<16x1xf32, #tpu.memory_space<vmem>>, vector<16x1xf32>
    %37 = vector.broadcast %36 : vector<16x1xf32> to vector<16x128xf32>
    %38 = arith.addf %35, %37 : vector<16x128xf32>
    %cst_21 = arith.constant 0.000000e+00 : f32
    %39 = vector.broadcast %cst_21 : f32 to vector<16x128xf32>
    %40 = arith.maximumf %38, %39 : vector<16x128xf32>
    %41 = vector.broadcast %0 : vector<1x128xf32> to vector<16x128xf32>
    %42 = arith.mulf %40, %41 : vector<16x128xf32>
    %c0_22 = arith.constant 0 : index
    %c0_23 = arith.constant 0 : index
    %43 = vector.load %arg9[%c0_22, %c0_23] : memref<16x32xbf16, #tpu.memory_space<vmem>>, vector<16x32xbf16>
    %c2_i32_24 = arith.constant 2 : i32
    %44 = tpu.dynamic_rotate %42 by %c2_i32_24 dim 1 : vector<16x128xf32>, i32 -> vector<16x128xf32>
    %45 = tpu.concatenate %44, %42 in 0 : vector<16x128xf32>, vector<16x128xf32> -> vector<32x128xf32>
    %46 = arith.truncf %45 : vector<32x128xf32> to vector<32x128xbf16>
    %cst_25 = arith.constant dense<0.000000e+00> : vector<16x128xf32>
    %47 = tpu.matmul %43, %46, %cst_25 {dimension_numbers = #tpu.dot_dimension_numbers<[1], [0], [0], [1], [0, 0, 1, 1], [], []>} : vector<16x32xbf16>, vector<32x128xbf16>, vector<16x128xf32> -> vector<16x128xf32>
    %c0_26 = arith.constant 0 : index
    %c0_27 = arith.constant 0 : index
    %48 = vector.load %arg10[%c0_26, %c0_27] : memref<16x1xf32, #tpu.memory_space<vmem>>, vector<16x1xf32>
    %49 = vector.broadcast %48 : vector<16x1xf32> to vector<16x128xf32>
    %50 = arith.addf %47, %49 : vector<16x128xf32>
    %cst_28 = arith.constant 0.000000e+00 : f32
    %51 = vector.broadcast %cst_28 : f32 to vector<16x128xf32>
    %52 = arith.maximumf %50, %51 : vector<16x128xf32>
    %53 = arith.addf %52, %30 : vector<16x128xf32>
    %cst_29 = arith.constant 0.000000e+00 : f32
    %54 = vector.broadcast %cst_29 : f32 to vector<16x128xf32>
    %55 = arith.maximumf %53, %54 : vector<16x128xf32>
    %56 = vector.broadcast %0 : vector<1x128xf32> to vector<16x128xf32>
    %57 = arith.mulf %55, %56 : vector<16x128xf32>
    %c0_30 = arith.constant 0 : index
    %c0_31 = arith.constant 0 : index
    %58 = vector.load %arg11[%c0_30, %c0_31] : memref<16x32xbf16, #tpu.memory_space<vmem>>, vector<16x32xbf16>
    %c4_i32 = arith.constant 4 : i32
    %59 = tpu.dynamic_rotate %57 by %c4_i32 dim 1 : vector<16x128xf32>, i32 -> vector<16x128xf32>
    %60 = tpu.concatenate %59, %57 in 0 : vector<16x128xf32>, vector<16x128xf32> -> vector<32x128xf32>
    %61 = arith.truncf %60 : vector<32x128xf32> to vector<32x128xbf16>
    %cst_32 = arith.constant dense<0.000000e+00> : vector<16x128xf32>
    %62 = tpu.matmul %58, %61, %cst_32 {dimension_numbers = #tpu.dot_dimension_numbers<[1], [0], [0], [1], [0, 0, 1, 1], [], []>} : vector<16x32xbf16>, vector<32x128xbf16>, vector<16x128xf32> -> vector<16x128xf32>
    %c0_33 = arith.constant 0 : index
    %c0_34 = arith.constant 0 : index
    %63 = vector.load %arg12[%c0_33, %c0_34] : memref<16x1xf32, #tpu.memory_space<vmem>>, vector<16x1xf32>
    %64 = vector.broadcast %63 : vector<16x1xf32> to vector<16x128xf32>
    %65 = arith.addf %62, %64 : vector<16x128xf32>
    %cst_35 = arith.constant 0.000000e+00 : f32
    %66 = vector.broadcast %cst_35 : f32 to vector<16x128xf32>
    %67 = arith.maximumf %65, %66 : vector<16x128xf32>
    %68 = vector.broadcast %0 : vector<1x128xf32> to vector<16x128xf32>
    %69 = arith.mulf %67, %68 : vector<16x128xf32>
    %c0_36 = arith.constant 0 : index
    %c0_37 = arith.constant 0 : index
    %70 = vector.load %arg13[%c0_36, %c0_37] : memref<16x32xbf16, #tpu.memory_space<vmem>>, vector<16x32xbf16>
    %c4_i32_38 = arith.constant 4 : i32
    %71 = tpu.dynamic_rotate %69 by %c4_i32_38 dim 1 : vector<16x128xf32>, i32 -> vector<16x128xf32>
    %72 = tpu.concatenate %71, %69 in 0 : vector<16x128xf32>, vector<16x128xf32> -> vector<32x128xf32>
    %73 = arith.truncf %72 : vector<32x128xf32> to vector<32x128xbf16>
    %cst_39 = arith.constant dense<0.000000e+00> : vector<16x128xf32>
    %74 = tpu.matmul %70, %73, %cst_39 {dimension_numbers = #tpu.dot_dimension_numbers<[1], [0], [0], [1], [0, 0, 1, 1], [], []>} : vector<16x32xbf16>, vector<32x128xbf16>, vector<16x128xf32> -> vector<16x128xf32>
    %c0_40 = arith.constant 0 : index
    %c0_41 = arith.constant 0 : index
    %75 = vector.load %arg14[%c0_40, %c0_41] : memref<16x1xf32, #tpu.memory_space<vmem>>, vector<16x1xf32>
    %76 = vector.broadcast %75 : vector<16x1xf32> to vector<16x128xf32>
    %77 = arith.addf %74, %76 : vector<16x128xf32>
    %cst_42 = arith.constant 0.000000e+00 : f32
    %78 = vector.broadcast %cst_42 : f32 to vector<16x128xf32>
    %79 = arith.maximumf %77, %78 : vector<16x128xf32>
    %80 = arith.addf %79, %57 : vector<16x128xf32>
    %cst_43 = arith.constant 0.000000e+00 : f32
    %81 = vector.broadcast %cst_43 : f32 to vector<16x128xf32>
    %82 = arith.maximumf %80, %81 : vector<16x128xf32>
    %c0_44 = arith.constant 0 : index
    %c0_45 = arith.constant 0 : index
    %83 = vector.load %arg15[%c0_44, %c0_45] : memref<16x128xf32, #tpu.memory_space<vmem>>, vector<16x128xf32>
    tpu.vector_store %arg15[%c0_44, %c0_45], %82 {strides = array<i32>} : memref<16x128xf32, #tpu.memory_space<vmem>>, vector<16x128xf32>,
    return
  }
  func.func @transform_0(%arg0: i32) -> (i32, i32) {
    %c0_i32 = arith.constant 0 : i32
    %c0_i32_0 = arith.constant 0 : i32
    %c0_i32_1 = arith.constant 0 : i32
    return %c0_i32, %c0_i32_0 : i32, i32
  }
  func.func @transform_1(%arg0: i32) -> (i32, i32) {
    %c0_i32 = arith.constant 0 : i32
    %c0_i32_0 = arith.constant 0 : i32
    return %c0_i32, %arg0 : i32, i32
  }
  func.func @transform_2(%arg0: i32) -> (i32, i32) {
    %c0_i32 = arith.constant 0 : i32
    %c0_i32_0 = arith.constant 0 : i32
    %c0_i32_1 = arith.constant 0 : i32
    return %c0_i32, %c0_i32_0 : i32, i32
  }
  func.func @transform_3(%arg0: i32) -> (i32, i32) {
    %c0_i32 = arith.constant 0 : i32
    %c0_i32_0 = arith.constant 0 : i32
    %c0_i32_1 = arith.constant 0 : i32
    return %c0_i32, %c0_i32_0 : i32, i32
  }
  func.func @transform_4(%arg0: i32) -> (i32, i32) {
    %c0_i32 = arith.constant 0 : i32
    %c0_i32_0 = arith.constant 0 : i32
    %c0_i32_1 = arith.constant 0 : i32
    return %c0_i32, %c0_i32_0 : i32, i32
  }
  func.func @transform_5(%arg0: i32) -> (i32, i32) {
    %c0_i32 = arith.constant 0 : i32
    %c0_i32_0 = arith.constant 0 : i32
    %c0_i32_1 = arith.constant 0 : i32
    return %c0_i32, %c0_i32_0 : i32, i32
  }
  func.func @transform_6(%arg0: i32) -> (i32, i32) {
    %c0_i32 = arith.constant 0 : i32
    %c0_i32_0 = arith.constant 0 : i32
    %c0_i32_1 = arith.constant 0 : i32
    return %c0_i32, %c0_i32_0 : i32, i32
  }
  func.func @transform_7(%arg0: i32) -> (i32, i32) {
    %c0_i32 = arith.constant 0 : i32
    %c0_i32_0 = arith.constant 0 : i32
    %c0_i32_1 = arith.constant 0 : i32
    return %c0_i32, %c0_i32_0 : i32, i32
  }
  func.func @transform_8(%arg0: i32) -> (i32, i32) {
    %c0_i32 = arith.constant 0 : i32
    %c0_i32_0 = arith.constant 0 : i32
    %c0_i32_1 = arith.constant 0 : i32
    return %c0_i32, %c0_i32_0 : i32, i32
  }
  func.func @transform_9(%arg0: i32) -> (i32, i32) {
    %c0_i32 = arith.constant 0 : i32
    %c0_i32_0 = arith.constant 0 : i32
    %c0_i32_1 = arith.constant 0 : i32
    return %c0_i32, %c0_i32_0 : i32, i32
  }
  func.func @transform_10(%arg0: i32) -> (i32, i32) {
    %c0_i32 = arith.constant 0 : i32
    %c0_i32_0 = arith.constant 0 : i32
    %c0_i32_1 = arith.constant 0 : i32
    return %c0_i32, %c0_i32_0 : i32, i32
  }
  func.func @transform_11(%arg0: i32) -> (i32, i32) {
    %c0_i32 = arith.constant 0 : i32
    %c0_i32_0 = arith.constant 0 : i32
    %c0_i32_1 = arith.constant 0 : i32
    return %c0_i32, %c0_i32_0 : i32, i32
  }
  func.func @transform_12(%arg0: i32) -> (i32, i32) {
    %c0_i32 = arith.constant 0 : i32
    %c0_i32_0 = arith.constant 0 : i32
    %c0_i32_1 = arith.constant 0 : i32
    return %c0_i32, %c0_i32_0 : i32, i32
  }
  func.func @transform_13(%arg0: i32) -> (i32, i32) {
    %c0_i32 = arith.constant 0 : i32
    %c0_i32_0 = arith.constant 0 : i32
    %c0_i32_1 = arith.constant 0 : i32
    return %c0_i32, %c0_i32_0 : i32, i32
  }
  func.func @transform_14(%arg0: i32) -> (i32, i32) {
    %c0_i32 = arith.constant 0 : i32
    %c0_i32_0 = arith.constant 0 : i32
    return %c0_i32, %arg0 : i32, i32
  }
}

</mosaic_0001>

<llo_original>
// kernel: tpu_custom_call.1
$region0: #{tpu_custom_call.1}
  #allocation0 [shape = 'u32[]', space=smem, size = 0x4, offset = 0x4, fixed_abs, tag = 'smem constant byte address 0x4 - core index']
  #allocation1 [shape = 'u32[144,128]{1,0:T(1,128)}', space=vmem, size = 0x12000, scoped, tag = 'internal scratch']
  %s0 = inlined_call_operand.vmem [shape: f32[1,128], index: 0, kind: input, shape index: {}]
  %s1 = inlined_call_operand.vmem [shape: f32[8,512], index: 1, kind: input, shape index: {}]
  %s2 = inlined_call_operand.vmem [shape: bf16[32,16], index: 2, kind: input, shape index: {}]
  %s3 = inlined_call_operand.vmem [shape: f32[32,1], index: 3, kind: input, shape index: {}]
  %s4 = inlined_call_operand.vmem [shape: bf16[16,32], index: 4, kind: input, shape index: {}]
  %s5 = inlined_call_operand.vmem [shape: f32[16,1], index: 5, kind: input, shape index: {}]
  %s6 = inlined_call_operand.vmem [shape: bf16[16,32], index: 6, kind: input, shape index: {}]
  %s7 = inlined_call_operand.vmem [shape: f32[16,1], index: 7, kind: input, shape index: {}]
  %s8 = inlined_call_operand.vmem [shape: bf16[16,32], index: 8, kind: input, shape index: {}]
  %s9 = inlined_call_operand.vmem [shape: f32[16,1], index: 9, kind: input, shape index: {}]
  %s10 = inlined_call_operand.vmem [shape: bf16[16,32], index: 10, kind: input, shape index: {}]
  %s11 = inlined_call_operand.vmem [shape: f32[16,1], index: 11, kind: input, shape index: {}]
  %s12 = inlined_call_operand.vmem [shape: bf16[16,32], index: 12, kind: input, shape index: {}]
  %s13 = inlined_call_operand.vmem [shape: f32[16,1], index: 13, kind: input, shape index: {}]
  %s14 = inlined_call_operand.hbm [shape: f32[16,512], index: 14, kind: output, shape index: {}]
  %s15 = sld [smem:[#allocation0]]
  $region89: #{tpu_custom_call.1} parent=0
    _
  %s17 = ssub.s32 1, %s15
  %s18 = scalar_select 0, %s17, %s15
  $region1: #{tpu_custom_call.1} parent=0
    #allocation2 [shape = 'u8[16384]{0}', space=vmem, size = 0x4000, scoped, tag = 'output window, operand 0']
    #allocation3 [shape = 's32[2]{0}', space=sflag, size = 0x8, scoped, tag = 'scoped memory for tpu_custom_call.1']
    %19 = vsyncpa [#allocation3], 0
    %s20 = scalar_lea.sflag [#allocation3], 1
    %21 = vsyncpa %s20, 0
    loop: start=0, step=1, limit=6
    $region2: #{tpu_custom_call.1} parent=1 // loop_pre_header
      _
    $region3: #{tpu_custom_call.1} parent=1 // loop_header
      %s23 = sphi 0, %s27
      %p24 = scmp.ge.s32.totalorder %s23, 6
      %s31 = sphi 0, %s31
      %s33 = sphi 0, %s31
      %s34 = sphi 0, %s33
      %s48 = sphi 0, %s34
      %s54 = sphi 0, %s56
      %s57 = sphi 0, %s54
      %s58 = sphi 0, %s57
      %s74 = sphi 0, %s58
      %s78 = sphi 0, %s78
      %s80 = sphi 0, %s78
      %s81 = sphi 0, %s80
      %s95 = sphi 0, %s81
      %s99 = sphi 0, %s99
      %s101 = sphi 0, %s99
      %s102 = sphi 0, %s101
      %s116 = sphi 0, %s102
      %s120 = sphi 0, %s120
      %s122 = sphi 0, %s120
      %s123 = sphi 0, %s122
      %s137 = sphi 0, %s123
      %s141 = sphi 0, %s141
      %s143 = sphi 0, %s141
      %s144 = sphi 0, %s143
      %s158 = sphi 0, %s144
      %s162 = sphi 0, %s162
      %s164 = sphi 0, %s162
      %s165 = sphi 0, %s164
      %s179 = sphi 0, %s165
      %s183 = sphi 0, %s183
      %s185 = sphi 0, %s183
      %s186 = sphi 0, %s185
      %s200 = sphi 0, %s186
      %s204 = sphi 0, %s204
      %s206 = sphi 0, %s204
      %s207 = sphi 0, %s206
      %s221 = sphi 0, %s207
      %s225 = sphi 0, %s225
      %s227 = sphi 0, %s225
      %s228 = sphi 0, %s227
      %s242 = sphi 0, %s228
      %s246 = sphi 0, %s246
      %s248 = sphi 0, %s246
      %s249 = sphi 0, %s248
      %s263 = sphi 0, %s249
      %s267 = sphi 0, %s267
      %s269 = sphi 0, %s267
      %s270 = sphi 0, %s269
      %s284 = sphi 0, %s270
      %s288 = sphi 0, %s288
      %s290 = sphi 0, %s288
      %s291 = sphi 0, %s290
      %s305 = sphi 0, %s291
      %s309 = sphi 0, %s309
      %s311 = sphi 0, %s309
      %s312 = sphi 0, %s311
      %s326 = sphi 0, %s312
      %s332 = sphi 0, %s334
      %s335 = sphi 0, %s332
      %s336 = sphi 0, %s335
      %s352 = sphi 0, %s336
    $region4: #{tpu_custom_call.1} parent=1 // loop_header_branch
      %26 = sbr.rel (%p24) target = $region8
    $region5: #{tpu_custom_call.1} parent=1 // loop_body
      %s28 = ssub.s32 %s23, 1
      %s29 = ssub.s32 %s23, 2
      %s30 = sadd.s32 %s23, 1
      %s32 = sadd.s32 %s31, 1
      %p35 = scmp.eq.s32.totalorder %s23, 3
      %p36 = scmp.ne.s32.totalorder %s31, %s33
      %p37 = scmp.eq.s32.totalorder %s23, 0
      %p38 = por %p36, %p37
      %p39 = scmp.ne.s32.totalorder %s31, %s33
      %p40 = scmp.eq.s32.totalorder %s28, 3
      %p41 = por %p39, %p40
      %p42 = scmp.ne.s32.totalorder %s33, %s34
      %p43 = scmp.eq.s32.totalorder %s28, 0
      %p44 = por %p42, %p43
      %p45 = scmp.ne.s32.totalorder %s33, %s34
      %p46 = scmp.eq.s32.totalorder %s29, 3
      %p47 = por %p45, %p46
      %p49 = scmp.ne.s32.totalorder %s34, %s48
      %p50 = scmp.eq.s32.totalorder %s29, 0
      %p51 = por %p49, %p50
      %s52 = ssub.s32 %s23, %s30
      %p53 = scmp.eq.s32.totalorder %s52, 0
      %s55 = sadd.s32 %s54, 1
      %s56 = scalar_select %p53, %s54, %s55
      %p59 = pneg %p53
      %p60 = scmp.eq.s32.totalorder %s23, 3
      %p61 = por %p59, %p60
      %p62 = scmp.ne.s32.totalorder %s54, %s57
      %p63 = scmp.eq.s32.totalorder %s23, 0
      %p64 = por %p62, %p63
      %p65 = scmp.ne.s32.totalorder %s54, %s57
      %p66 = scmp.eq.s32.totalorder %s28, 3
      %p67 = por %p65, %p66
      %p68 = scmp.ne.s32.totalorder %s57, %s58
      %p69 = scmp.eq.s32.totalorder %s28, 0
      %p70 = por %p68, %p69
      %p71 = scmp.ne.s32.totalorder %s57, %s58
      %p72 = scmp.eq.s32.totalorder %s29, 3
      %p73 = por %p71, %p72
      %p75 = scmp.ne.s32.totalorder %s58, %s74
      %p76 = scmp.eq.s32.totalorder %s29, 0
      %p77 = por %p75, %p76
      %s79 = sadd.s32 %s78, 1
      %p82 = scmp.eq.s32.totalorder %s23, 3
      %p83 = scmp.ne.s32.totalorder %s78, %s80
      %p84 = scmp.eq.s32.totalorder %s23, 0
      %p85 = por %p83, %p84
      %p86 = scmp.ne.s32.totalorder %s78, %s80
      %p87 = scmp.eq.s32.totalorder %s28, 3
      %p88 = por %p86, %p87
      %p89 = scmp.ne.s32.totalorder %s80, %s81
      %p90 = scmp.eq.s32.totalorder %s28, 0
      %p91 = por %p89, %p90
      %p92 = scmp.ne.s32.totalorder %s80, %s81
      %p93 = scmp.eq.s32.totalorder %s29, 3
      %p94 = por %p92, %p93
      %p96 = scmp.ne.s32.totalorder %s81, %s95
      %p97 = scmp.eq.s32.totalorder %s29, 0
      %p98 = por %p96, %p97
      %s100 = sadd.s32 %s99, 1
      %p103 = scmp.eq.s32.totalorder %s23, 3
      %p104 = scmp.ne.s32.totalorder %s99, %s101
      %p105 = scmp.eq.s32.totalorder %s23, 0
      %p106 = por %p104, %p105
      %p107 = scmp.ne.s32.totalorder %s99, %s101
      %p108 = scmp.eq.s32.totalorder %s28, 3
      %p109 = por %p107, %p108
      %p110 = scmp.ne.s32.totalorder %s101, %s102
      %p111 = scmp.eq.s32.totalorder %s28, 0
      %p112 = por %p110, %p111
      %p113 = scmp.ne.s32.totalorder %s101, %s102
      %p114 = scmp.eq.s32.totalorder %s29, 3
      %p115 = por %p113, %p114
      %p117 = scmp.ne.s32.totalorder %s102, %s116
      %p118 = scmp.eq.s32.totalorder %s29, 0
      %p119 = por %p117, %p118
      %s121 = sadd.s32 %s120, 1
      %p124 = scmp.eq.s32.totalorder %s23, 3
      %p125 = scmp.ne.s32.totalorder %s120, %s122
      %p126 = scmp.eq.s32.totalorder %s23, 0
      %p127 = por %p125, %p126
      %p128 = scmp.ne.s32.totalorder %s120, %s122
      %p129 = scmp.eq.s32.totalorder %s28, 3
      %p130 = por %p128, %p129
      %p131 = scmp.ne.s32.totalorder %s122, %s123
      %p132 = scmp.eq.s32.totalorder %s28, 0
      %p133 = por %p131, %p132
      %p134 = scmp.ne.s32.totalorder %s122, %s123
      %p135 = scmp.eq.s32.totalorder %s29, 3
      %p136 = por %p134, %p135
      %p138 = scmp.ne.s32.totalorder %s123, %s137
      %p139 = scmp.eq.s32.totalorder %s29, 0
      %p140 = por %p138, %p139
      %s142 = sadd.s32 %s141, 1
      %p145 = scmp.eq.s32.totalorder %s23, 3
      %p146 = scmp.ne.s32.totalorder %s141, %s143
      %p147 = scmp.eq.s32.totalorder %s23, 0
      %p148 = por %p146, %p147
      %p149 = scmp.ne.s32.totalorder %s141, %s143
      %p150 = scmp.eq.s32.totalorder %s28, 3
      %p151 = por %p149, %p150
      %p152 = scmp.ne.s32.totalorder %s143, %s144
      %p153 = scmp.eq.s32.totalorder %s28, 0
      %p154 = por %p152, %p153
      %p155 = scmp.ne.s32.totalorder %s143, %s144
      %p156 = scmp.eq.s32.totalorder %s29, 3
      %p157 = por %p155, %p156
      %p159 = scmp.ne.s32.totalorder %s144, %s158
      %p160 = scmp.eq.s32.totalorder %s29, 0
      %p161 = por %p159, %p160
      %s163 = sadd.s32 %s162, 1
      %p166 = scmp.eq.s32.totalorder %s23, 3
      %p167 = scmp.ne.s32.totalorder %s162, %s164
      %p168 = scmp.eq.s32.totalorder %s23, 0
      %p169 = por %p167, %p168
      %p170 = scmp.ne.s32.totalorder %s162, %s164
      %p171 = scmp.eq.s32.totalorder %s28, 3
      %p172 = por %p170, %p171
      %p173 = scmp.ne.s32.totalorder %s164, %s165
      %p174 = scmp.eq.s32.totalorder %s28, 0
      %p175 = por %p173, %p174
      %p176 = scmp.ne.s32.totalorder %s164, %s165
      %p177 = scmp.eq.s32.totalorder %s29, 3
      %p178 = por %p176, %p177
      %p180 = scmp.ne.s32.totalorder %s165, %s179
      %p181 = scmp.eq.s32.totalorder %s29, 0
      %p182 = por %p180, %p181
      %s184 = sadd.s32 %s183, 1
      %p187 = scmp.eq.s32.totalorder %s23, 3
      %p188 = scmp.ne.s32.totalorder %s183, %s185
      %p189 = scmp.eq.s32.totalorder %s23, 0
      %p190 = por %p188, %p189
      %p191 = scmp.ne.s32.totalorder %s183, %s185
      %p192 = scmp.eq.s32.totalorder %s28, 3
      %p193 = por %p191, %p192
      %p194 = scmp.ne.s32.totalorder %s185, %s186
      %p195 = scmp.eq.s32.totalorder %s28, 0
      %p196 = por %p194, %p195
      %p197 = scmp.ne.s32.totalorder %s185, %s186
      %p198 = scmp.eq.s32.totalorder %s29, 3
      %p199 = por %p197, %p198
      %p201 = scmp.ne.s32.totalorder %s186, %s200
      %p202 = scmp.eq.s32.totalorder %s29, 0
      %p203 = por %p201, %p202
      %s205 = sadd.s32 %s204, 1
      %p208 = scmp.eq.s32.totalorder %s23, 3
      %p209 = scmp.ne.s32.totalorder %s204, %s206
      %p210 = scmp.eq.s32.totalorder %s23, 0
      %p211 = por %p209, %p210
      %p212 = scmp.ne.s32.totalorder %s204, %s206
      %p213 = scmp.eq.s32.totalorder %s28, 3
      %p214 = por %p212, %p213
      %p215 = scmp.ne.s32.totalorder %s206, %s207
      %p216 = scmp.eq.s32.totalorder %s28, 0
      %p217 = por %p215, %p216
      %p218 = scmp.ne.s32.totalorder %s206, %s207
      %p219 = scmp.eq.s32.totalorder %s29, 3
      %p220 = por %p218, %p219
      %p222 = scmp.ne.s32.totalorder %s207, %s221
      %p223 = scmp.eq.s32.totalorder %s29, 0
      %p224 = por %p222, %p223
      %s226 = sadd.s32 %s225, 1
      %p229 = scmp.eq.s32.totalorder %s23, 3
      %p230 = scmp.ne.s32.totalorder %s225, %s227
      %p231 = scmp.eq.s32.totalorder %s23, 0
      %p232 = por %p230, %p231
      %p233 = scmp.ne.s32.totalorder %s225, %s227
      %p234 = scmp.eq.s32.totalorder %s28, 3
      %p235 = por %p233, %p234
      %p236 = scmp.ne.s32.totalorder %s227, %s228
      %p237 = scmp.eq.s32.totalorder %s28, 0
      %p238 = por %p236, %p237
      %p239 = scmp.ne.s32.totalorder %s227, %s228
      %p240 = scmp.eq.s32.totalorder %s29, 3
      %p241 = por %p239, %p240
      %p243 = scmp.ne.s32.totalorder %s228, %s242
      %p244 = scmp.eq.s32.totalorder %s29, 0
      %p245 = por %p243, %p244
      %s247 = sadd.s32 %s246, 1
      %p250 = scmp.eq.s32.totalorder %s23, 3
      %p251 = scmp.ne.s32.totalorder %s246, %s248
      %p252 = scmp.eq.s32.totalorder %s23, 0
      %p253 = por %p251, %p252
      %p254 = scmp.ne.s32.totalorder %s246, %s248
      %p255 = scmp.eq.s32.totalorder %s28, 3
      %p256 = por %p254, %p255
      %p257 = scmp.ne.s32.totalorder %s248, %s249
      %p258 = scmp.eq.s32.totalorder %s28, 0
      %p259 = por %p257, %p258
      %p260 = scmp.ne.s32.totalorder %s248, %s249
      %p261 = scmp.eq.s32.totalorder %s29, 3
      %p262 = por %p260, %p261
      %p264 = scmp.ne.s32.totalorder %s249, %s263
      %p265 = scmp.eq.s32.totalorder %s29, 0
      %p266 = por %p264, %p265
      %s268 = sadd.s32 %s267, 1
      %p271 = scmp.eq.s32.totalorder %s23, 3
      %p272 = scmp.ne.s32.totalorder %s267, %s269
      %p273 = scmp.eq.s32.totalorder %s23, 0
      %p274 = por %p272, %p273
      %p275 = scmp.ne.s32.totalorder %s267, %s269
      %p276 = scmp.eq.s32.totalorder %s28, 3
      %p277 = por %p275, %p276
      %p278 = scmp.ne.s32.totalorder %s269, %s270
      %p279 = scmp.eq.s32.totalorder %s28, 0
      %p280 = por %p278, %p279
      %p281 = scmp.ne.s32.totalorder %s269, %s270
      %p282 = scmp.eq.s32.totalorder %s29, 3
      %p283 = por %p281, %p282
      %p285 = scmp.ne.s32.totalorder %s270, %s284
      %p286 = scmp.eq.s32.totalorder %s29, 0
      %p287 = por %p285, %p286
      %s289 = sadd.s32 %s288, 1
      %p292 = scmp.eq.s32.totalorder %s23, 3
      %p293 = scmp.ne.s32.totalorder %s288, %s290
      %p294 = scmp.eq.s32.totalorder %s23, 0
      %p295 = por %p293, %p294
      %p296 = scmp.ne.s32.totalorder %s288, %s290
      %p297 = scmp.eq.s32.totalorder %s28, 3
      %p298 = por %p296, %p297
      %p299 = scmp.ne.s32.totalorder %s290, %s291
      %p300 = scmp.eq.s32.totalorder %s28, 0
      %p301 = por %p299, %p300
      %p302 = scmp.ne.s32.totalorder %s290, %s291
      %p303 = scmp.eq.s32.totalorder %s29, 3
      %p304 = por %p302, %p303
      %p306 = scmp.ne.s32.totalorder %s291, %s305
      %p307 = scmp.eq.s32.totalorder %s29, 0
      %p308 = por %p306, %p307
      %s310 = sadd.s32 %s309, 1
      %p313 = scmp.eq.s32.totalorder %s23, 3
      %p314 = scmp.ne.s32.totalorder %s309, %s311
      %p315 = scmp.eq.s32.totalorder %s23, 0
      %p316 = por %p314, %p315
      %p317 = scmp.ne.s32.totalorder %s309, %s311
      %p318 = scmp.eq.s32.totalorder %s28, 3
      %p319 = por %p317, %p318
      %p320 = scmp.ne.s32.totalorder %s311, %s312
      %p321 = scmp.eq.s32.totalorder %s28, 0
      %p322 = por %p320, %p321
      %p323 = scmp.ne.s32.totalorder %s311, %s312
      %p324 = scmp.eq.s32.totalorder %s29, 3
      %p325 = por %p323, %p324
      %p327 = scmp.ne.s32.totalorder %s312, %s326
      %p328 = scmp.eq.s32.totalorder %s29, 0
      %p329 = por %p327, %p328
      %s330 = ssub.s32 %s23, %s30
      %p331 = scmp.eq.s32.totalorder %s330, 0
      %s333 = sadd.s32 %s332, 1
      %s334 = scalar_select %p331, %s332, %s333
      %p337 = pneg %p331
      %p338 = scmp.eq.s32.totalorder %s23, 3
      %p339 = por %p337, %p338
      %p340 = scmp.ne.s32.totalorder %s332, %s335
      %p341 = scmp.eq.s32.totalorder %s23, 0
      %p342 = por %p340, %p341
      %p343 = scmp.ne.s32.totalorder %s332, %s335
      %p344 = scmp.eq.s32.totalorder %s28, 3
      %p345 = por %p343, %p344
      %p346 = scmp.ne.s32.totalorder %s335, %s336
      %p347 = scmp.eq.s32.totalorder %s28, 0
      %p348 = por %p346, %p347
      %p349 = scmp.ne.s32.totalorder %s335, %s336
      %p350 = scmp.eq.s32.totalorder %s29, 3
      %p351 = por %p349, %p350
      %p353 = scmp.ne.s32.totalorder %s336, %s352
      %p354 = scmp.eq.s32.totalorder %s29, 0
      %p355 = por %p353, %p354
      %p356 = scmp.le.s32.totalorder 1, %s23
      %p357 = scmp.lt.s32.totalorder %s23, 5
      %p358 = pnand %p356, %p357
      %p359 = pneg %p358
      // Predicated region
      $region9: #{tpu_custom_call.1} parent=5 // pred_check
        _
      $region10: #{tpu_custom_call.1} parent=5 // pred_check_branch
        %361 = sbr.rel (%p358) target = $region12
      $region11: #{tpu_custom_call.1} parent=5 // pred_region
        %s362 = ssub.s32 %s23, 1
        // Predicated region
        $region13: #{tpu_custom_call.1} parent=11 // pred_check
          %p363 = pneg %p44
        $region14: #{tpu_custom_call.1} parent=11 // pred_check_branch
          %365 = sbr.rel (%p363) target = $region16
        $region15: #{tpu_custom_call.1} parent=11 // pred_region
          _
        $region16: #{tpu_custom_call.1} parent=11 // pred_fallthru
          _
        // Predicated region
        $region17: #{tpu_custom_call.1} parent=11 // pred_check
          %p366 = pneg %p91
        $region18: #{tpu_custom_call.1} parent=11 // pred_check_branch
          %368 = sbr.rel (%p366) target = $region20
        $region19: #{tpu_custom_call.1} parent=11 // pred_region
          _
        $region20: #{tpu_custom_call.1} parent=11 // pred_fallthru
          _
        // Predicated region
        $region21: #{tpu_custom_call.1} parent=11 // pred_check
          %p369 = pneg %p112
        $region22: #{tpu_custom_call.1} parent=11 // pred_check_branch
          %371 = sbr.rel (%p369) target = $region24
        $region23: #{tpu_custom_call.1} parent=11 // pred_region
          _
        $region24: #{tpu_custom_call.1} parent=11 // pred_fallthru
          _
        // Predicated region
        $region25: #{tpu_custom_call.1} parent=11 // pred_check
          %p372 = pneg %p133
        $region26: #{tpu_custom_call.1} parent=11 // pred_check_branch
          %374 = sbr.rel (%p372) target = $region28
        $region27: #{tpu_custom_call.1} parent=11 // pred_region
          _
        $region28: #{tpu_custom_call.1} parent=11 // pred_fallthru
          _
        // Predicated region
        $region29: #{tpu_custom_call.1} parent=11 // pred_check
          %p375 = pneg %p154
        $region30: #{tpu_custom_call.1} parent=11 // pred_check_branch
          %377 = sbr.rel (%p375) target = $region32
        $region31: #{tpu_custom_call.1} parent=11 // pred_region
          _
        $region32: #{tpu_custom_call.1} parent=11 // pred_fallthru
          _
        // Predicated region
        $region33: #{tpu_custom_call.1} parent=11 // pred_check
          %p378 = pneg %p175
        $region34: #{tpu_custom_call.1} parent=11 // pred_check_branch
          %380 = sbr.rel (%p378) target = $region36
        $region35: #{tpu_custom_call.1} parent=11 // pred_region
          _
        $region36: #{tpu_custom_call.1} parent=11 // pred_fallthru
          _
        // Predicated region
        $region37: #{tpu_custom_call.1} parent=11 // pred_check
          %p381 = pneg %p196
        $region38: #{tpu_custom_call.1} parent=11 // pred_check_branch
          %383 = sbr.rel (%p381) target = $region40
        $region39: #{tpu_custom_call.1} parent=11 // pred_region
          _
        $region40: #{tpu_custom_call.1} parent=11 // pred_fallthru
          _
        // Predicated region
        $region41: #{tpu_custom_call.1} parent=11 // pred_check
          %p384 = pneg %p217
        $region42: #{tpu_custom_call.1} parent=11 // pred_check_branch
          %386 = sbr.rel (%p384) target = $region44
        $region43: #{tpu_custom_call.1} parent=11 // pred_region
          _
        $region44: #{tpu_custom_call.1} parent=11 // pred_fallthru
          _
        // Predicated region
        $region45: #{tpu_custom_call.1} parent=11 // pred_check
          %p387 = pneg %p238
        $region46: #{tpu_custom_call.1} parent=11 // pred_check_branch
          %389 = sbr.rel (%p387) target = $region48
        $region47: #{tpu_custom_call.1} parent=11 // pred_region
          _
        $region48: #{tpu_custom_call.1} parent=11 // pred_fallthru
          _
        // Predicated region
        $region49: #{tpu_custom_call.1} parent=11 // pred_check
          %p390 = pneg %p259
        $region50: #{tpu_custom_call.1} parent=11 // pred_check_branch
          %392 = sbr.rel (%p390) target = $region52
        $region51: #{tpu_custom_call.1} parent=11 // pred_region
          _
        $region52: #{tpu_custom_call.1} parent=11 // pred_fallthru
          _
        // Predicated region
        $region53: #{tpu_custom_call.1} parent=11 // pred_check
          %p393 = pneg %p280
        $region54: #{tpu_custom_call.1} parent=11 // pred_check_branch
          %395 = sbr.rel (%p393) target = $region56
        $region55: #{tpu_custom_call.1} parent=11 // pred_region
          _
        $region56: #{tpu_custom_call.1} parent=11 // pred_fallthru
          _
        // Predicated region
        $region57: #{tpu_custom_call.1} parent=11 // pred_check
          %p396 = pneg %p301
        $region58: #{tpu_custom_call.1} parent=11 // pred_check_branch
          %398 = sbr.rel (%p396) target = $region60
        $region59: #{tpu_custom_call.1} parent=11 // pred_region
          _
        $region60: #{tpu_custom_call.1} parent=11 // pred_fallthru
          _
        // Predicated region
        $region61: #{tpu_custom_call.1} parent=11 // pred_check
          %p399 = pneg %p322
        $region62: #{tpu_custom_call.1} parent=11 // pred_check_branch
          %401 = sbr.rel (%p399) target = $region64
        $region63: #{tpu_custom_call.1} parent=11 // pred_region
          _
        $region64: #{tpu_custom_call.1} parent=11 // pred_fallthru
          _
      $region12: #{tpu_custom_call.1} parent=5 // pred_fallthru
        _
      %p402 = scmp.lt.s32.totalorder %s23, 4
      // Predicated region
      $region65: #{tpu_custom_call.1} parent=5 // pred_check
        %p403 = pneg %p402
      $region66: #{tpu_custom_call.1} parent=5 // pred_check_branch
        %405 = sbr.rel (%p403) target = $region68
      $region67: #{tpu_custom_call.1} parent=5 // pred_region
        // Predicated region
        $region69: #{tpu_custom_call.1} parent=67 // pred_check
          %p406 = pneg %p64
        $region70: #{tpu_custom_call.1} parent=67 // pred_check_branch
          %408 = sbr.rel (%p406) target = $region72
        $region71: #{tpu_custom_call.1} parent=67 // pred_region
          %p409 = scmp.lt.s32.totalorder %s23, 3
          %s410 = scalar_select %p409, %s23, 3
          %s411 = smul.addr %s410, 8
          %s412 = scalar_lea.vmem %s1, %s411
        $region72: #{tpu_custom_call.1} parent=67 // pred_fallthru
          _
      $region68: #{tpu_custom_call.1} parent=5 // pred_fallthru
        _
      %p413 = scmp.le.s32.totalorder 1, %s23
      %p414 = scmp.lt.s32.totalorder %s23, 5
      %p415 = pnand %p413, %p414
      %p416 = pneg %p415
      // Predicated region
      $region73: #{tpu_custom_call.1} parent=5 // pred_check
        _
      $region74: #{tpu_custom_call.1} parent=5 // pred_check_branch
        %418 = sbr.rel (%p415) target = $region76
      $region75: #{tpu_custom_call.1} parent=5 // pred_region
        %s419 = ssub.s32 %s23, 1
        %p420 = pneg %p44
        %p421 = pneg %p41
        %p422 = scmp.lt.s32.totalorder %s28, 3
        %s423 = scalar_select %p422, %s28, 3
        %s424 = smul.addr %s423, 8
        %s425 = scalar_lea.vmem %s1, %s424
        %p426 = pneg %p70
        %p427 = pneg %p67
        %p428 = pneg %p91
        %p429 = pneg %p88
        %p430 = pneg %p112
        %p431 = pneg %p109
        %p432 = pneg %p133
        %p433 = pneg %p130
        %p434 = pneg %p154
        %p435 = pneg %p151
        %p436 = pneg %p175
        %p437 = pneg %p172
        %p438 = pneg %p196
        %p439 = pneg %p193
        %p440 = pneg %p217
        %p441 = pneg %p214
        %p442 = pneg %p238
        %p443 = pneg %p235
        %p444 = pneg %p259
        %p445 = pneg %p256
        %p446 = pneg %p280
        %p447 = pneg %p277
        %p448 = pneg %p301
        %p449 = pneg %p298
        %p450 = pneg %p322
        %p451 = pneg %p319
        %p452 = pneg %p348
        %p453 = pneg %p345
        %s454 = sand.u32 %s335, 1
        %s455 = scalar_lea.sflag [#allocation3], %s454
        %s456 = sand.u32 %s335, 1
        %s457 = smul.addr %s456, 16
        %s458 = scalar_lea.vmem [#allocation2], %s457
        %p459 = scmp.lt.s32.totalorder %s28, 3
        %s460 = scalar_select %p459, %s28, 3
        %s461 = smul.addr %s460, 8
        %s462 = scalar_lea.vmem %s1, %s461
        %v464 = vld [vmem:[%s0] sm:$0x1]
        %v465 = vld [vmem:[%s462] sm:$0xff]
        %v466 = vld [vmem:[%s2] sm:$0xf]
        %v467 = vld [vmem:[%s2 + $0x4] sm:$0xf]
        %v468 = vld [vmem:[%s2 + $0x8] sm:$0xf]
        %v469 = vld [vmem:[%s2 + $0xc] sm:$0xf]
        %470 = vrot.lane.b32.xlu0 %v465, 1
        %v471 = vpop.permute.xlu0 %470
        %v472 = vpack.c.bf16 %v465, %v471
        %v473 = vld [vmem:[%s3] sm:$0xff]
        %v474 = vld [vmem:[%s3 + $0x8] sm:$0xff]
        %v475 = vld [vmem:[%s3 + $0x10] sm:$0xff]
        %v476 = vld [vmem:[%s3 + $0x18] sm:$0xff]
        %478 = vset.pattern.permute.xlu0 0
        %479 = vperm.xlu0 %478, %v473
        %v480 = vpop.permute.xlu0 %479
        %483 = vset.pattern.permute.xlu0 0
        %484 = vperm.xlu0 %483, %v474
        %v485 = vpop.permute.xlu0 %484
        %488 = vset.pattern.permute.xlu0 0
        %489 = vperm.xlu0 %488, %v475
        %v490 = vpop.permute.xlu0 %489
        %493 = vset.pattern.permute.xlu0 0
        %494 = vperm.xlu0 %493, %v476
        %v495 = vpop.permute.xlu0 %494
        %v501 = vunpack.c.l.b16 %v466
        %v502 = vunpack.c.l.b16 %v467
        %v503 = vunpack.c.l.b16 %v468
        %v504 = vunpack.c.l.b16 %v469
        %v505 = vpack.c.b16 %v502, %v501
        %v506 = vpack.c.b16 %v504, %v503
        %vm507 = vcmask 130048
        %v509 = vsel %vm507, %v505, 0
        %v512 = vsel %vm507, %v506, 0
        %514 = vmatprep.subr.bf16.mxu0 0
        %515 = vmatpush1.bf16.msra.mxu0 %v472
        %516 = vmatprep.subr.bf16.mxu0 0
        %517 = vmatpush1.bf16.msra.mxu0 0
        %518 = vmatprep.subr.bf16.mxu0 0
        %519 = vmatpush1.bf16.msra.mxu0 0
        %520 = vmatprep.subr.bf16.mxu0 0
        %521 = vmatpush1.bf16.msra.mxu0 0
        %522 = vmatprep.subr.bf16.mxu0 0
        %523 = vmatpush1.bf16.msra.mxu0 0
        %524 = vmatprep.subr.bf16.mxu0 0
        %525 = vmatpush1.bf16.msra.mxu0 0
        %526 = vmatprep.subr.bf16.mxu0 0
        %527 = vmatpush1.bf16.msra.mxu0 0
        %528 = vmatprep.subr.bf16.mxu0 0
        %529 = vmatpush1.bf16.msra.mxu0 0
        %530 = vmatprep.subr.bf16.mxu0 0
        %531 = vmatpush1.bf16.msra.mxu0 0
        %532 = vmatprep.subr.bf16.mxu0 0
        %533 = vmatpush1.bf16.msra.mxu0 0
        %534 = vmatprep.subr.bf16.mxu0 0
        %535 = vmatpush1.bf16.msra.mxu0 0
        %536 = vmatprep.subr.bf16.mxu0 0
        %537 = vmatpush1.bf16.msra.mxu0 0
        %538 = vmatprep.subr.bf16.mxu0 0
        %539 = vmatpush1.bf16.msra.mxu0 0
        %540 = vmatprep.subr.bf16.mxu0 0
        %541 = vmatpush1.bf16.msra.mxu0 0
        %542 = vmatprep.subr.bf16.mxu0 0
        %543 = vmatpush1.bf16.msra.mxu0 0
        %544 = vmatprep.subr.bf16.mxu0 0
        %545 = vmatpush1.bf16.msra.mxu0 0
        %546 = vmatprep.mubr.bf16.mxu0 0
        %547 = vmatmul.mubr.bf16.gmra.mrb[0].mxu0 %v509
        %v548 = vpop.f32.mrb[0].mxu0
        %v549 = vadd.f32 %v480, %v548
        %v550 = vpop.f32.mrb[0].mxu0
        %v551 = vpop.f32.mrb[0].mxu0
        %v552 = vadd.f32 %v485, %v551
        %v553 = vpop.f32.mrb[0].mxu0
        %554 = vmatprep.mubr.bf16.mxu0 0
        %555 = vmatmul.mubr.bf16.gmra.mrb[0].mxu0 %v512
        %v556 = vpop.f32.mrb[0].mxu0
        %v557 = vadd.f32 %v490, %v556
        %v558 = vpop.f32.mrb[0].mxu0
        %v559 = vpop.f32.mrb[0].mxu0
        %v560 = vadd.f32 %v495, %v559
        %v561 = vpop.f32.mrb[0].mxu0
        %562 = vdwg.mxu0
        %v563 = vmax.f32 %v549, 0.0
        %v564 = vmax.f32 %v552, 0.0
        %v566 = vlaneseq
        %v567 = vshrl.u32 %v566, 7
        %v568 = vsub.s32 0, %v567
        %v569 = vrot.slane %v464, %v568
        %v571 = vmul.f32 %v563, %v569
        %v572 = vmul.f32 %v564, %v569
        %v573 = vld [vmem:[%s4] sm:$0xf]
        %v574 = vld [vmem:[%s4 + $0x4] sm:$0xf]
        %575 = vrot.lane.b32.xlu0 %v571, 1
        %v576 = vpop.permute.xlu0 %575
        %577 = vrot.lane.b32.xlu0 %v572, 1
        %v578 = vpop.permute.xlu0 %577
        %v579 = vpack.c.bf16 %v578, %v576
        %v580 = vpack.c.bf16 %v572, %v571
        %v581 = vld [vmem:[%s5] sm:$0xff]
        %v582 = vld [vmem:[%s5 + $0x8] sm:$0xff]
        %584 = vset.pattern.permute.xlu0 0
        %585 = vperm.xlu0 %584, %v581
        %v586 = vpop.permute.xlu0 %585
        %589 = vset.pattern.permute.xlu0 0
        %590 = vperm.xlu0 %589, %v582
        %v591 = vpop.permute.xlu0 %590
        %v595 = vunpack.c.l.b16 %v573
        %v596 = vunpack.c.l.b16 %v574
        %v597 = vpack.c.b16 %v596, %v595
        %vm598 = vcmask 261120
        %v600 = vsel %vm598, %v597, 0
        %602 = vmatprep.subr.bf16.mxu0 0
        %603 = vmatpush1.bf16.msra.mxu0 %v579
        %604 = vmatprep.subr.bf16.mxu0 0
        %605 = vmatpush1.bf16.msra.mxu0 %v580
        %606 = vmatprep.subr.bf16.mxu0 0
        %607 = vmatpush1.bf16.msra.mxu0 0
        %608 = vmatprep.subr.bf16.mxu0 0
        %609 = vmatpush1.bf16.msra.mxu0 0
        %610 = vmatprep.subr.bf16.mxu0 0
        %611 = vmatpush1.bf16.msra.mxu0 0
        %612 = vmatprep.subr.bf16.mxu0 0
        %613 = vmatpush1.bf16.msra.mxu0 0
        %614 = vmatprep.subr.bf16.mxu0 0
        %615 = vmatpush1.bf16.msra.mxu0 0
        %616 = vmatprep.subr.bf16.mxu0 0
        %617 = vmatpush1.bf16.msra.mxu0 0
        %618 = vmatprep.subr.bf16.mxu0 0
        %619 = vmatpush1.bf16.msra.mxu0 0
        %620 = vmatprep.subr.bf16.mxu0 0
        %621 = vmatpush1.bf16.msra.mxu0 0
        %622 = vmatprep.subr.bf16.mxu0 0
        %623 = vmatpush1.bf16.msra.mxu0 0
        %624 = vmatprep.subr.bf16.mxu0 0
        %625 = vmatpush1.bf16.msra.mxu0 0
        %626 = vmatprep.subr.bf16.mxu0 0
        %627 = vmatpush1.bf16.msra.mxu0 0
        %628 = vmatprep.subr.bf16.mxu0 0
        %629 = vmatpush1.bf16.msra.mxu0 0
        %630 = vmatprep.subr.bf16.mxu0 0
        %631 = vmatpush1.bf16.msra.mxu0 0
        %632 = vmatprep.subr.bf16.mxu0 0
        %633 = vmatpush1.bf16.msra.mxu0 0
        %634 = vmatprep.mubr.bf16.mxu0 0
        %635 = vmatmul.mubr.bf16.gmra.mrb[0].mxu0 %v600
        %v636 = vpop.f32.mrb[0].mxu0
        %v637 = vadd.f32 %v586, %v636
        %v638 = vpop.f32.mrb[0].mxu0
        %v639 = vpop.f32.mrb[0].mxu0
        %v640 = vadd.f32 %v591, %v639
        %v641 = vpop.f32.mrb[0].mxu0
        %642 = vdwg.mxu0
        %v643 = vmax.f32 %v637, 0.0
        %v644 = vmax.f32 %v640, 0.0
        %v645 = vadd.f32 %v643, %v557
        %v646 = vadd.f32 %v644, %v560
        %v647 = vmax.f32 %v645, 0.0
        %v648 = vmax.f32 %v646, 0.0
        %v649 = vmul.f32 %v647, %v569
        %v650 = vmul.f32 %v648, %v569
        %v651 = vld [vmem:[%s6] sm:$0xf]
        %v652 = vld [vmem:[%s6 + $0x4] sm:$0xf]
        %653 = vrot.lane.b32.xlu0 %v649, 2
        %v654 = vpop.permute.xlu0 %653
        %655 = vrot.lane.b32.xlu0 %v650, 2
        %v656 = vpop.permute.xlu0 %655
        %v657 = vpack.c.bf16 %v656, %v654
        %v658 = vpack.c.bf16 %v650, %v649
        %v659 = vld [vmem:[%s7] sm:$0xff]
        %v660 = vld [vmem:[%s7 + $0x8] sm:$0xff]
        %662 = vset.pattern.permute.xlu0 0
        %663 = vperm.xlu0 %662, %v659
        %v664 = vpop.permute.xlu0 %663
        %667 = vset.pattern.permute.xlu0 0
        %668 = vperm.xlu0 %667, %v660
        %v669 = vpop.permute.xlu0 %668
        %v673 = vunpack.c.l.b16 %v651
        %v674 = vunpack.c.l.b16 %v652
        %v675 = vpack.c.b16 %v674, %v673
        %v677 = vsel %vm598, %v675, 0
        %679 = vmatprep.subr.bf16.mxu0 0
        %680 = vmatpush1.bf16.msra.mxu0 %v657
        %681 = vmatprep.subr.bf16.mxu0 0
        %682 = vmatpush1.bf16.msra.mxu0 %v658
        %683 = vmatprep.subr.bf16.mxu0 0
        %684 = vmatpush1.bf16.msra.mxu0 0
        %685 = vmatprep.subr.bf16.mxu0 0
        %686 = vmatpush1.bf16.msra.mxu0 0
        %687 = vmatprep.subr.bf16.mxu0 0
        %688 = vmatpush1.bf16.msra.mxu0 0
        %689 = vmatprep.subr.bf16.mxu0 0
        %690 = vmatpush1.bf16.msra.mxu0 0
        %691 = vmatprep.subr.bf16.mxu0 0
        %692 = vmatpush1.bf16.msra.mxu0 0
        %693 = vmatprep.subr.bf16.mxu0 0
        %694 = vmatpush1.bf16.msra.mxu0 0
        %695 = vmatprep.subr.bf16.mxu0 0
        %696 = vmatpush1.bf16.msra.mxu0 0
        %697 = vmatprep.subr.bf16.mxu0 0
        %698 = vmatpush1.bf16.msra.mxu0 0
        %699 = vmatprep.subr.bf16.mxu0 0
        %700 = vmatpush1.bf16.msra.mxu0 0
        %701 = vmatprep.subr.bf16.mxu0 0
        %702 = vmatpush1.bf16.msra.mxu0 0
        %703 = vmatprep.subr.bf16.mxu0 0
        %704 = vmatpush1.bf16.msra.mxu0 0
        %705 = vmatprep.subr.bf16.mxu0 0
        %706 = vmatpush1.bf16.msra.mxu0 0
        %707 = vmatprep.subr.bf16.mxu0 0
        %708 = vmatpush1.bf16.msra.mxu0 0
        %709 = vmatprep.subr.bf16.mxu0 0
        %710 = vmatpush1.bf16.msra.mxu0 0
        %711 = vmatprep.mubr.bf16.mxu0 0
        %712 = vmatmul.mubr.bf16.gmra.mrb[0].mxu0 %v677
        %v713 = vpop.f32.mrb[0].mxu0
        %v714 = vadd.f32 %v664, %v713
        %v715 = vpop.f32.mrb[0].mxu0
        %v716 = vpop.f32.mrb[0].mxu0
        %v717 = vadd.f32 %v669, %v716
        %v718 = vpop.f32.mrb[0].mxu0
        %719 = vdwg.mxu0
        %v720 = vmax.f32 %v714, 0.0
        %v721 = vmax.f32 %v717, 0.0
        %v722 = vmul.f32 %v720, %v569
        %v723 = vmul.f32 %v721, %v569
        %v724 = vld [vmem:[%s8] sm:$0xf]
        %v725 = vld [vmem:[%s8 + $0x4] sm:$0xf]
        %726 = vrot.lane.b32.xlu0 %v722, 2
        %v727 = vpop.permute.xlu0 %726
        %728 = vrot.lane.b32.xlu0 %v723, 2
        %v729 = vpop.permute.xlu0 %728
        %v730 = vpack.c.bf16 %v729, %v727
        %v731 = vpack.c.bf16 %v723, %v722
        %v732 = vld [vmem:[%s9] sm:$0xff]
        %v733 = vld [vmem:[%s9 + $0x8] sm:$0xff]
        %735 = vset.pattern.permute.xlu0 0
        %736 = vperm.xlu0 %735, %v732
        %v737 = vpop.permute.xlu0 %736
        %740 = vset.pattern.permute.xlu0 0
        %741 = vperm.xlu0 %740, %v733
        %v742 = vpop.permute.xlu0 %741
        %v746 = vunpack.c.l.b16 %v724
        %v747 = vunpack.c.l.b16 %v725
        %v748 = vpack.c.b16 %v747, %v746
        %v750 = vsel %vm598, %v748, 0
        %752 = vmatprep.subr.bf16.mxu0 0
        %753 = vmatpush1.bf16.msra.mxu0 %v730
        %754 = vmatprep.subr.bf16.mxu0 0
        %755 = vmatpush1.bf16.msra.mxu0 %v731
        %756 = vmatprep.subr.bf16.mxu0 0
        %757 = vmatpush1.bf16.msra.mxu0 0
        %758 = vmatprep.subr.bf16.mxu0 0
        %759 = vmatpush1.bf16.msra.mxu0 0
        %760 = vmatprep.subr.bf16.mxu0 0
        %761 = vmatpush1.bf16.msra.mxu0 0
        %762 = vmatprep.subr.bf16.mxu0 0
        %763 = vmatpush1.bf16.msra.mxu0 0
        %764 = vmatprep.subr.bf16.mxu0 0
        %765 = vmatpush1.bf16.msra.mxu0 0
        %766 = vmatprep.subr.bf16.mxu0 0
        %767 = vmatpush1.bf16.msra.mxu0 0
        %768 = vmatprep.subr.bf16.mxu0 0
        %769 = vmatpush1.bf16.msra.mxu0 0
        %770 = vmatprep.subr.bf16.mxu0 0
        %771 = vmatpush1.bf16.msra.mxu0 0
        %772 = vmatprep.subr.bf16.mxu0 0
        %773 = vmatpush1.bf16.msra.mxu0 0
        %774 = vmatprep.subr.bf16.mxu0 0
        %775 = vmatpush1.bf16.msra.mxu0 0
        %776 = vmatprep.subr.bf16.mxu0 0
        %777 = vmatpush1.bf16.msra.mxu0 0
        %778 = vmatprep.subr.bf16.mxu0 0
        %779 = vmatpush1.bf16.msra.mxu0 0
        %780 = vmatprep.subr.bf16.mxu0 0
        %781 = vmatpush1.bf16.msra.mxu0 0
        %782 = vmatprep.subr.bf16.mxu0 0
        %783 = vmatpush1.bf16.msra.mxu0 0
        %784 = vmatprep.mubr.bf16.mxu0 0
        %785 = vmatmul.mubr.bf16.gmra.mrb[0].mxu0 %v750
        %v786 = vpop.f32.mrb[0].mxu0
        %v787 = vadd.f32 %v737, %v786
        %v788 = vpop.f32.mrb[0].mxu0
        %v789 = vpop.f32.mrb[0].mxu0
        %v790 = vadd.f32 %v742, %v789
        %v791 = vpop.f32.mrb[0].mxu0
        %792 = vdwg.mxu0
        %v793 = vmax.f32 %v787, 0.0
        %v794 = vmax.f32 %v790, 0.0
        %v795 = vadd.f32 %v793, %v649
        %v796 = vadd.f32 %v794, %v650
        %v797 = vmax.f32 %v795, 0.0
        %v798 = vmax.f32 %v796, 0.0
        %v799 = vmul.f32 %v797, %v569
        %v800 = vmul.f32 %v798, %v569
        %v801 = vld [vmem:[%s10] sm:$0xf]
        %v802 = vld [vmem:[%s10 + $0x4] sm:$0xf]
        %803 = vrot.lane.b32.xlu0 %v799, 4
        %v804 = vpop.permute.xlu0 %803
        %805 = vrot.lane.b32.xlu0 %v800, 4
        %v806 = vpop.permute.xlu0 %805
        %v807 = vpack.c.bf16 %v806, %v804
        %v808 = vpack.c.bf16 %v800, %v799
        %v809 = vld [vmem:[%s11] sm:$0xff]
        %v810 = vld [vmem:[%s11 + $0x8] sm:$0xff]
        %812 = vset.pattern.permute.xlu0 0
        %813 = vperm.xlu0 %812, %v809
        %v814 = vpop.permute.xlu0 %813
        %817 = vset.pattern.permute.xlu0 0
        %818 = vperm.xlu0 %817, %v810
        %v819 = vpop.permute.xlu0 %818
        %v823 = vunpack.c.l.b16 %v801
        %v824 = vunpack.c.l.b16 %v802
        %v825 = vpack.c.b16 %v824, %v823
        %v827 = vsel %vm598, %v825, 0
        %829 = vmatprep.subr.bf16.mxu0 0
        %830 = vmatpush1.bf16.msra.mxu0 %v807
        %831 = vmatprep.subr.bf16.mxu0 0
        %832 = vmatpush1.bf16.msra.mxu0 %v808
        %833 = vmatprep.subr.bf16.mxu0 0
        %834 = vmatpush1.bf16.msra.mxu0 0
        %835 = vmatprep.subr.bf16.mxu0 0
        %836 = vmatpush1.bf16.msra.mxu0 0
        %837 = vmatprep.subr.bf16.mxu0 0
        %838 = vmatpush1.bf16.msra.mxu0 0
        %839 = vmatprep.subr.bf16.mxu0 0
        %840 = vmatpush1.bf16.msra.mxu0 0
        %841 = vmatprep.subr.bf16.mxu0 0
        %842 = vmatpush1.bf16.msra.mxu0 0
        %843 = vmatprep.subr.bf16.mxu0 0
        %844 = vmatpush1.bf16.msra.mxu0 0
        %845 = vmatprep.subr.bf16.mxu0 0
        %846 = vmatpush1.bf16.msra.mxu0 0
        %847 = vmatprep.subr.bf16.mxu0 0
        %848 = vmatpush1.bf16.msra.mxu0 0
        %849 = vmatprep.subr.bf16.mxu0 0
        %850 = vmatpush1.bf16.msra.mxu0 0
        %851 = vmatprep.subr.bf16.mxu0 0
        %852 = vmatpush1.bf16.msra.mxu0 0
        %853 = vmatprep.subr.bf16.mxu0 0
        %854 = vmatpush1.bf16.msra.mxu0 0
        %855 = vmatprep.subr.bf16.mxu0 0
        %856 = vmatpush1.bf16.msra.mxu0 0
        %857 = vmatprep.subr.bf16.mxu0 0
        %858 = vmatpush1.bf16.msra.mxu0 0
        %859 = vmatprep.subr.bf16.mxu0 0
        %860 = vmatpush1.bf16.msra.mxu0 0
        %861 = vmatprep.mubr.bf16.mxu0 0
        %862 = vmatmul.mubr.bf16.gmra.mrb[0].mxu0 %v827
        %v863 = vpop.f32.mrb[0].mxu0
        %v864 = vadd.f32 %v814, %v863
        %v865 = vpop.f32.mrb[0].mxu0
        %v866 = vpop.f32.mrb[0].mxu0
        %v867 = vadd.f32 %v819, %v866
        %v868 = vpop.f32.mrb[0].mxu0
        %869 = vdwg.mxu0
        %v870 = vmax.f32 %v864, 0.0
        %v871 = vmax.f32 %v867, 0.0
        %v872 = vmul.f32 %v870, %v569
        %v873 = vmul.f32 %v871, %v569
        %v874 = vld [vmem:[%s12] sm:$0xf]
        %v875 = vld [vmem:[%s12 + $0x4] sm:$0xf]
        %876 = vrot.lane.b32.xlu0 %v872, 4
        %v877 = vpop.permute.xlu0 %876
        %878 = vrot.lane.b32.xlu0 %v873, 4
        %v879 = vpop.permute.xlu0 %878
        %v880 = vpack.c.bf16 %v879, %v877
        %v881 = vpack.c.bf16 %v873, %v872
        %v882 = vld [vmem:[%s13] sm:$0xff]
        %v883 = vld [vmem:[%s13 + $0x8] sm:$0xff]
        %885 = vset.pattern.permute.xlu0 0
        %886 = vperm.xlu0 %885, %v882
        %v887 = vpop.permute.xlu0 %886
        %890 = vset.pattern.permute.xlu0 0
        %891 = vperm.xlu0 %890, %v883
        %v892 = vpop.permute.xlu0 %891
        %v896 = vunpack.c.l.b16 %v874
        %v897 = vunpack.c.l.b16 %v875
        %v898 = vpack.c.b16 %v897, %v896
        %v900 = vsel %vm598, %v898, 0
        %902 = vmatprep.subr.bf16.mxu0 0
        %903 = vmatpush1.bf16.msra.mxu0 %v880
        %904 = vmatprep.subr.bf16.mxu0 0
        %905 = vmatpush1.bf16.msra.mxu0 %v881
        %906 = vmatprep.subr.bf16.mxu0 0
        %907 = vmatpush1.bf16.msra.mxu0 0
        %908 = vmatprep.subr.bf16.mxu0 0
        %909 = vmatpush1.bf16.msra.mxu0 0
        %910 = vmatprep.subr.bf16.mxu0 0
        %911 = vmatpush1.bf16.msra.mxu0 0
        %912 = vmatprep.subr.bf16.mxu0 0
        %913 = vmatpush1.bf16.msra.mxu0 0
        %914 = vmatprep.subr.bf16.mxu0 0
        %915 = vmatpush1.bf16.msra.mxu0 0
        %916 = vmatprep.subr.bf16.mxu0 0
        %917 = vmatpush1.bf16.msra.mxu0 0
        %918 = vmatprep.subr.bf16.mxu0 0
        %919 = vmatpush1.bf16.msra.mxu0 0
        %920 = vmatprep.subr.bf16.mxu0 0
        %921 = vmatpush1.bf16.msra.mxu0 0
        %922 = vmatprep.subr.bf16.mxu0 0
        %923 = vmatpush1.bf16.msra.mxu0 0
        %924 = vmatprep.subr.bf16.mxu0 0
        %925 = vmatpush1.bf16.msra.mxu0 0
        %926 = vmatprep.subr.bf16.mxu0 0
        %927 = vmatpush1.bf16.msra.mxu0 0
        %928 = vmatprep.subr.bf16.mxu0 0
        %929 = vmatpush1.bf16.msra.mxu0 0
        %930 = vmatprep.subr.bf16.mxu0 0
        %931 = vmatpush1.bf16.msra.mxu0 0
        %932 = vmatprep.subr.bf16.mxu0 0
        %933 = vmatpush1.bf16.msra.mxu0 0
        %934 = vmatprep.mubr.bf16.mxu0 0
        %935 = vmatmul.mubr.bf16.gmra.mrb[0].mxu0 %v900
        %v936 = vpop.f32.mrb[0].mxu0
        %v937 = vadd.f32 %v887, %v936
        %v938 = vpop.f32.mrb[0].mxu0
        %v939 = vpop.f32.mrb[0].mxu0
        %v940 = vadd.f32 %v892, %v939
        %v941 = vpop.f32.mrb[0].mxu0
        %942 = vdwg.mxu0
        %v943 = vmax.f32 %v937, 0.0
        %v944 = vmax.f32 %v940, 0.0
        %v945 = vadd.f32 %v943, %v799
        %v946 = vadd.f32 %v944, %v800
        %v947 = vmax.f32 %v945, 0.0
        %v948 = vmax.f32 %v946, 0.0
        %949 = vst [vmem:[%s458] sm:$0xff] %v947
        %950 = vst [vmem:[%s458 + $0x8] sm:$0xff] %v948
        %s951 = sand.u32 %s335, 1
        %s952 = scalar_lea.sflag [#allocation3], %s951
        %s953 = sand.u32 %s335, 1
        %s954 = smul.addr %s953, 16
        %s955 = scalar_lea.vmem [#allocation2], %s954
        // Predicated region
        $region77: #{tpu_custom_call.1} parent=75 // pred_check
          %p956 = pneg %p345
        $region78: #{tpu_custom_call.1} parent=75 // pred_check_branch
          %958 = sbr.rel (%p956) target = $region80
        $region79: #{tpu_custom_call.1} parent=75 // pred_region
          %s960 = ssub.s32 256, 256
          %961 = vsyncadd %s952, %s960
          %s962 = smul.addr %s28, 128
          %s963 = scalar_lea.hbm %s14, %s962
          %s964 = sshll.u32 %s955, 4
          %s965 = int_to_ptr.vmem [resolvable:$true] %s964
          %970 = dma.vmem_to_hbm [thread:$0]  %s965, 256, %s963, %s952, 128, 512, 8
        $region80: #{tpu_custom_call.1} parent=75 // pred_fallthru
          _
      $region76: #{tpu_custom_call.1} parent=5 // pred_fallthru
        _
      %p971 = scmp.le.s32.totalorder 2, %s23
      // Predicated region
      $region81: #{tpu_custom_call.1} parent=5 // pred_check
        %p972 = pneg %p971
      $region82: #{tpu_custom_call.1} parent=5 // pred_check_branch
        %974 = sbr.rel (%p972) target = $region84
      $region83: #{tpu_custom_call.1} parent=5 // pred_region
        %s975 = ssub.s32 %s23, 2
        // Predicated region
        $region85: #{tpu_custom_call.1} parent=83 // pred_check
          %p976 = pneg %p351
        $region86: #{tpu_custom_call.1} parent=83 // pred_check_branch
          %978 = sbr.rel (%p976) target = $region88
        $region87: #{tpu_custom_call.1} parent=83 // pred_region
          %s979 = sand.u32 %s336, 1
          %s980 = scalar_lea.sflag [#allocation3], %s979
          %s981 = sand.u32 %s336, 1
          %s982 = smul.addr %s981, 16
          %s983 = scalar_lea.vmem [#allocation2], %s982
          %984 = dma.done %s980, 256
        $region88: #{tpu_custom_call.1} parent=83 // pred_fallthru
          _
      $region84: #{tpu_custom_call.1} parent=5 // pred_fallthru
        _
    $region6: #{tpu_custom_call.1} parent=1 // loop_footer
      %s27 = sadd.s32 1, %s23
    $region7: #{tpu_custom_call.1} parent=1 // loop_footer_branch
      %22 = sbr.rel target = $region3
    $region8: #{tpu_custom_call.1} parent=1 // loop_exit
      _
    %985 = vsyncpa [#allocation3], 1
    %s986 = scalar_lea.sflag [#allocation3], 1
    %987 = vsyncpa %s986, 1

</llo_original>
